<compile_context>
chip_gen: v5e
topology: v5e:2x2
jax: 0.10.0
libtpu: 0.0.40
codegen_flags: <defaults>
</compile_context>

<pallas_src>
import functools

import jax
import jax.numpy as jnp
from jax.experimental import pallas as pl
from jax.experimental.pallas import tpu as pltpu


def _round_up(a, b):
    return (a + b - 1) // b * b


# ----------------------------- Pallas kernels ------------------------------


def _linear_relu_kernel(x_ref, w_ref, b_ref, o_ref):
    """Eval-mode forward: relu(x @ w + b). Dropout is identity in eval."""
    y = jnp.dot(x_ref[...], w_ref[...], preferred_element_type=jnp.float32)
    y = jnp.maximum(y + b_ref[...], 0.0)          # b_ref is [1, TN], broadcasts over rows
    o_ref[...] = y.astype(o_ref.dtype)


def _linear_relu_dropout_kernel(x_ref, w_ref, b_ref, bits_ref, o_ref, *, threshold, scale):
    """Train-mode forward: inverted dropout (integer-threshold compare) after relu."""
    y = jnp.dot(x_ref[...], w_ref[...], preferred_element_type=jnp.float32)
    y = jnp.maximum(y + b_ref[...], 0.0)
    keep = bits_ref[...] >= jnp.uint32(threshold)         # P(keep) = 1 - rate
    o_ref[...] = jnp.where(keep, y * jnp.float32(scale), 0.0).astype(o_ref.dtype)


# ------------------------------- Wrapper ------------------------------------


class LinearPallas:
    """Pallas equivalent of the PyTorch `Linear` module (Linear -> ReLU -> Dropout)."""

    def __init__(self, d_model, d_ff, dropout=0.1, key=None):
        self.d_model = d_model
        self.d_ff = d_ff
        self.rate = float(dropout)

        if key is None:
            key = jax.random.PRNGKey(0)
        kw, kb = jax.random.split(key)
        # Deterministic init mimicking nn.Linear's uniform(-1/sqrt(fan_in), 1/sqrt(fan_in)).
        bound = 1.0 / (d_model ** 0.5)
        self.weight = jax.random.uniform(
            kw, (d_ff, d_model), jnp.float32, minval=-bound, maxval=bound)
        self.bias = jax.random.uniform(
            kb, (d_ff,), jnp.float32, minval=-bound, maxval=bound)

        # Lane (d_ff) tiling constants — TN is a multiple of 128 for unmasked stores.
        self.TN = min(512, _round_up(d_ff, 128))
        self.n_pad = _round_up(d_ff, self.TN)

        # Pre-transpose + pre-pad + bf16-cast the weight ONCE (not per call).
        w_t = self.weight.T                                   # [d_model, d_ff]
        if self.n_pad > d_ff:
            w_t = jnp.pad(w_t, ((0, 0), (0, self.n_pad - d_ff)))
        self.weight_t = w_t.astype(jnp.bfloat16)              # [d_model, n_pad]

        b = self.bias
        if self.n_pad > d_ff:
            b = jnp.pad(b, (0, self.n_pad - d_ff))
        self.bias_p = b.reshape(1, self.n_pad).astype(jnp.float32)

    def __call__(self, x, *, training=False, dropout_seed=0):
        orig_shape = x.shape
        assert orig_shape[-1] == self.d_model
        m = 1
        for s in orig_shape[:-1]:
            m *= s
        K = self.d_model

        # Tile sizes: modest so double-buffered blocks stay well inside the scoped VMEM
        # budget on every generation (v7x: 32 MiB scoped / 64 MiB physical).
        TM = min(256, _round_up(m, 8))
        m_pad = _round_up(m, TM)
        TN = self.TN
        n_pad = self.n_pad

        x2 = x.reshape(m, K).astype(jnp.bfloat16)
        if m_pad > m:
            x2 = jnp.pad(x2, ((0, m_pad - m), (0, 0)))

        # N outer / M inner: the weight block index (0, j) is constant across the inner
        # axis, so Pallas keeps it resident instead of re-DMAing it per M tile.
        grid = (n_pad // TN, m_pad // TM)

        x_spec = pl.BlockSpec((TM, K), lambda j, i: (i, 0))
        w_spec = pl.BlockSpec((K, TN), lambda j, i: (0, j))
        b_spec = pl.BlockSpec((1, TN), lambda j, i: (0, j))
        o_spec = pl.BlockSpec((TM, TN), lambda j, i: (i, j))

        out_shape = jax.ShapeDtypeStruct((m_pad, n_pad), jnp.float32)
        compiler_params = pltpu.CompilerParams(
            dimension_semantics=("parallel", "parallel"),
            vmem_limit_bytes=32 * 1024 * 1024)

        flops = 2 * m_pad * K * n_pad
        base_bytes = (m_pad * K * 2          # x (bf16)
                      + K * n_pad * 2        # weight (bf16)
                      + n_pad * 4            # bias (f32)
                      + m_pad * n_pad * 4)   # output (f32)

        if training and self.rate > 0.0:
            # Random bits generated once per call in the wrapper (independent per element),
            # streamed tile-by-tile alongside the output tile.
            bits = jax.random.bits(jax.random.PRNGKey(dropout_seed),
                                   (m_pad, n_pad), dtype=jnp.uint32)
            bits_spec = pl.BlockSpec((TM, TN), lambda j, i: (i, j))
            threshold = min(int(round(self.rate * (1 << 32))), (1 << 32) - 1)
            kernel = functools.partial(
                _linear_relu_dropout_kernel,
                threshold=threshold,
                scale=1.0 / (1.0 - self.rate))
            y2 = pl.pallas_call(
                kernel,
                out_shape=out_shape,
                grid=grid,
                in_specs=[x_spec, w_spec, b_spec, bits_spec],
                out_specs=o_spec,
                compiler_params=compiler_params,
                cost_estimate=pl.CostEstimate(
                    flops=flops, transcendentals=0,
                    bytes_accessed=base_bytes + m_pad * n_pad * 4),
            )(x2, self.weight_t, self.bias_p, bits)
        else:
            # Dropout is identity at inference time.
            y2 = pl.pallas_call(
                _linear_relu_kernel,
                out_shape=out_shape,
                grid=grid,
                in_specs=[x_spec, w_spec, b_spec],
                out_specs=o_spec,
                compiler_params=compiler_params,
                cost_estimate=pl.CostEstimate(
                    flops=flops, transcendentals=0, bytes_accessed=base_bytes),
            )(x2, self.weight_t, self.bias_p)

        y2 = y2[:m, :self.d_ff]
        return y2.reshape(*orig_shape[:-1], self.d_ff)


# --------------------------------- Main --------------------------------------

if __name__ == "__main__":
    # Shapes consistent with FusionModel.linear_layer: d_model = hidden*4, d_ff = hidden.
    batch, seq, hidden = 2, 8, 128
    d_model, d_ff = hidden * 4, hidden

    key = jax.random.PRNGKey(0)
    k_x, k_params = jax.random.split(key)
    x = jax.random.normal(k_x, (batch, seq, d_model), dtype=jnp.float32)

    module = LinearPallas(d_model, d_ff, dropout=0.1, key=k_params)

    # Eval-mode forward (dropout = identity) — check against a pure-JAX reference that uses
    # the same bf16-input / f32-accumulate matmul.
    y = module(x, training=False)
    y = jax.block_until_ready(y)

    x2 = x.reshape(-1, d_model).astype(jnp.bfloat16)
    ref = jnp.maximum(
        jnp.dot(x2, module.weight_t[:, :d_ff], preferred_element_type=jnp.float32)
        + module.bias, 0.0)
    assert y.shape == (batch, seq, d_ff)
    assert jnp.allclose(y.reshape(-1, d_ff), ref, atol=1e-2, rtol=1e-2)

    # Train-mode forward (stochastic inverted dropout).
    y_tr = module(x, training=True, dropout_seed=42)
    y_tr = jax.block_until_ready(y_tr)
    assert y_tr.shape == (batch, seq, d_ff)
    y2 = y_tr.reshape(-1, d_ff)
    kept = y2 != 0.0
    scale = 1.0 / (1.0 - module.rate)
    # Dropped positions are exactly zero; kept positions equal ref / (1 - p).
    assert jnp.allclose(jnp.where(kept, y2, 0.0),
                        jnp.where(kept, ref * scale, 0.0),
                        atol=1e-2, rtol=1e-2)

    print("KERNEL_OK")
</pallas_src>

<mosaic_0001>
module attributes {stable_mosaic.version = 11 : i64} {
  func.func @_linear_relu_kernel(%arg0: i32, %arg1: i32, %arg2: memref<16x512xbf16, #tpu.memory_space<vmem>>, %arg3: memref<512x128xbf16, #tpu.memory_space<vmem>>, %arg4: memref<1x128xf32, #tpu.memory_space<vmem>>, %arg5: memref<16x128xf32, #tpu.memory_space<vmem>>) attributes {dimension_semantics = [#tpu.dimension_semantics<parallel>, #tpu.dimension_semantics<parallel>], iteration_bounds = array<i64: 1, 1>, scalar_prefetch = 0 : i64, scratch_operands = 0 : i64, tpu.core_type = #tpu.core_type<tc>, window_params = [{transform_indices = @transform_0, window_bounds = array<i64: 16, 512>}, {transform_indices = @transform_1, window_bounds = array<i64: 512, 128>}, {transform_indices = @transform_2, window_bounds = array<i64: 1, 128>}, {transform_indices = @transform_3, window_bounds = array<i64: 16, 128>}]} {
    %c0 = arith.constant 0 : index
    %c0_0 = arith.constant 0 : index
    %0 = vector.load %arg2[%c0, %c0_0] : memref<16x512xbf16, #tpu.memory_space<vmem>>, vector<16x512xbf16>
    %c0_1 = arith.constant 0 : index
    %c0_2 = arith.constant 0 : index
    %1 = vector.load %arg3[%c0_1, %c0_2] : memref<512x128xbf16, #tpu.memory_space<vmem>>, vector<512x128xbf16>
    %cst = arith.constant dense<0.000000e+00> : vector<16x128xf32>
    %2 = tpu.matmul %0, %1, %cst {dimension_numbers = #tpu.dot_dimension_numbers<[1], [0], [0], [1], [0, 0, 1, 1], [], []>} : vector<16x512xbf16>, vector<512x128xbf16>, vector<16x128xf32> -> vector<16x128xf32>
    %c0_3 = arith.constant 0 : index
    %c0_4 = arith.constant 0 : index
    %3 = vector.load %arg4[%c0_3, %c0_4] : memref<1x128xf32, #tpu.memory_space<vmem>>, vector<1x128xf32>
    %4 = vector.broadcast %3 : vector<1x128xf32> to vector<16x128xf32>
    %5 = arith.addf %2, %4 : vector<16x128xf32>
    %cst_5 = arith.constant 0.000000e+00 : f32
    %6 = vector.broadcast %cst_5 : f32 to vector<16x128xf32>
    %7 = arith.maximumf %5, %6 : vector<16x128xf32>
    %c0_6 = arith.constant 0 : index
    %c0_7 = arith.constant 0 : index
    %8 = vector.load %arg5[%c0_6, %c0_7] : memref<16x128xf32, #tpu.memory_space<vmem>>, vector<16x128xf32>
    tpu.vector_store %arg5[%c0_6, %c0_7], %7 {strides = array<i32>} : memref<16x128xf32, #tpu.memory_space<vmem>>, vector<16x128xf32>,
    return
  }
  func.func @transform_0(%arg0: i32, %arg1: i32) -> (i32, i32) {
    %c0_i32 = arith.constant 0 : i32
    %c0_i32_0 = arith.constant 0 : i32
    return %arg1, %c0_i32 : i32, i32
  }
  func.func @transform_1(%arg0: i32, %arg1: i32) -> (i32, i32) {
    %c0_i32 = arith.constant 0 : i32
    %c0_i32_0 = arith.constant 0 : i32
    return %c0_i32, %arg0 : i32, i32
  }
  func.func @transform_2(%arg0: i32, %arg1: i32) -> (i32, i32) {
    %c0_i32 = arith.constant 0 : i32
    %c0_i32_0 = arith.constant 0 : i32
    return %c0_i32, %arg0 : i32, i32
  }
  func.func @transform_3(%arg0: i32, %arg1: i32) -> (i32, i32) {
    %c0_i32 = arith.constant 0 : i32
    return %arg1, %arg0 : i32, i32
  }
}

</mosaic_0001>

<llo_original>
// kernel: tpu_custom_call.1
$region0: #{tpu_custom_call.1}
  #allocation0 [shape = 'u32[]', space=smem, size = 0x4, offset = 0x4, fixed_abs, tag = 'smem constant byte address 0x4 - core index']
  #allocation1 [shape = 'u32[72,128]{1,0:T(1,128)}', space=vmem, size = 0x9000, scoped, tag = 'internal scratch']
  %s0 = inlined_call_operand.hbm [shape: bf16[16,512], index: 0, kind: input, shape index: {}]
  %s1 = inlined_call_operand.hbm [shape: bf16[512,128], index: 1, kind: input, shape index: {}]
  %s2 = inlined_call_operand.vmem [shape: f32[1,128], index: 2, kind: input, shape index: {}]
  %s3 = inlined_call_operand.hbm [shape: f32[16,128], index: 3, kind: output, shape index: {}]
  %s4 = sld [smem:[#allocation0]]
  $region30: #{tpu_custom_call.1} parent=0
    _
  %s6 = ssub.s32 1, %s4
  %s7 = scalar_select 0, %s6, %s4
  $region1: #{tpu_custom_call.1} parent=0
    #allocation2 [shape = 'u8[16384]{0}', space=vmem, size = 0x4000, scoped, tag = 'input window, operand 0, single buffered']
    #allocation3 [shape = 's32[1]{0}', space=sflag, size = 0x4, scoped, tag = 'scoped memory for tpu_custom_call.1']
    #allocation4 [shape = 's32[1]{0}', space=sflag, size = 0x4, scoped, tag = 'scoped memory for tpu_custom_call.1']
    #allocation5 [shape = 'u8[131072]{0}', space=vmem, size = 0x20000, scoped, tag = 'input window, operand 1, single buffered']
    #allocation6 [shape = 's32[1]{0}', space=sflag, size = 0x4, scoped, tag = 'scoped memory for tpu_custom_call.1']
    #allocation7 [shape = 'u8[8192]{0}', space=vmem, size = 0x2000, scoped, tag = 'output window, operand 0, single buffered']
    %8 = vsyncpa [#allocation3], 0
    %9 = vsyncpa [#allocation6], 0
    %10 = vsyncpa [#allocation4], 0
    // Predicated region
    $region2: #{tpu_custom_call.1} parent=1 // pred_check
      _
    $region3: #{tpu_custom_call.1} parent=1 // pred_check_branch
      %12 = sbr.rel (0) target = $region5
    $region4: #{tpu_custom_call.1} parent=1 // pred_region
      %14 = vsyncadd [#allocation3], 0
      %s15 = sshll.u32 %s0, 4
      %s16 = int_to_ptr.hbm [resolvable:$true] %s15
      %s17 = sshll.u32 [#allocation2], 4
      %s18 = int_to_ptr.vmem [resolvable:$true] %s17
      %23 = dma.hbm_to_vmem [thread:$0]  %s16, 512, %s18, [#allocation3], 256, 256, 16
    $region5: #{tpu_custom_call.1} parent=1 // pred_fallthru
      _
    // Predicated region
    $region6: #{tpu_custom_call.1} parent=1 // pred_check
      _
    $region7: #{tpu_custom_call.1} parent=1 // pred_check_branch
      %25 = sbr.rel (0) target = $region9
    $region8: #{tpu_custom_call.1} parent=1 // pred_region
      %27 = vsyncadd [#allocation6], 0
      %s28 = sshll.u32 %s1, 4
      %s29 = int_to_ptr.hbm [resolvable:$true] %s28
      %s30 = sshll.u32 [#allocation5], 4
      %s31 = int_to_ptr.vmem [resolvable:$true] %s30
      %36 = dma.hbm_to_vmem [thread:$0]  %s29, 4096, %s31, [#allocation6], 64, 64, 4
    $region9: #{tpu_custom_call.1} parent=1 // pred_fallthru
      _
    // Predicated region
    $region10: #{tpu_custom_call.1} parent=1 // pred_check
      _
    $region11: #{tpu_custom_call.1} parent=1 // pred_check_branch
      %38 = sbr.rel (0) target = $region13
    $region12: #{tpu_custom_call.1} parent=1 // pred_region
      _
    $region13: #{tpu_custom_call.1} parent=1 // pred_fallthru
      _
    // Predicated region
    $region14: #{tpu_custom_call.1} parent=1 // pred_check
      _
    $region15: #{tpu_custom_call.1} parent=1 // pred_check_branch
      %40 = sbr.rel (0) target = $region17
    $region16: #{tpu_custom_call.1} parent=1 // pred_region
      %42 = dma.done [#allocation3], 512
    $region17: #{tpu_custom_call.1} parent=1 // pred_fallthru
      _
    // Predicated region
    $region18: #{tpu_custom_call.1} parent=1 // pred_check
      _
    $region19: #{tpu_custom_call.1} parent=1 // pred_check_branch
      %44 = sbr.rel (0) target = $region21
    $region20: #{tpu_custom_call.1} parent=1 // pred_region
      %46 = dma.done [#allocation6], 4096
    $region21: #{tpu_custom_call.1} parent=1 // pred_fallthru
      _
    %v47 = vld [vmem:[#allocation2] sm:$0xff]
    %v48 = vld [vmem:[#allocation2 + $0x8] sm:$0xff]
    %v49 = vld [vmem:[#allocation2 + $0x10] sm:$0xff]
    %v50 = vld [vmem:[#allocation2 + $0x18] sm:$0xff]
    %v51 = vld [vmem:[#allocation5] sm:$0xf]
    %v52 = vld [vmem:[#allocation5 + $0x4] sm:$0xf]
    %v53 = vld [vmem:[#allocation5 + $0x8] sm:$0xf]
    %v54 = vld [vmem:[#allocation5 + $0xc] sm:$0xf]
    %v55 = vld [vmem:[#allocation5 + $0x10] sm:$0xf]
    %v56 = vld [vmem:[#allocation5 + $0x14] sm:$0xf]
    %v57 = vld [vmem:[#allocation5 + $0x18] sm:$0xf]
    %v58 = vld [vmem:[#allocation5 + $0x1c] sm:$0xf]
    %v59 = vld [vmem:[#allocation5 + $0x20] sm:$0xf]
    %v60 = vld [vmem:[#allocation5 + $0x24] sm:$0xf]
    %v61 = vld [vmem:[#allocation5 + $0x28] sm:$0xf]
    %v62 = vld [vmem:[#allocation5 + $0x2c] sm:$0xf]
    %v63 = vld [vmem:[#allocation5 + $0x30] sm:$0xf]
    %v64 = vld [vmem:[#allocation5 + $0x34] sm:$0xf]
    %v65 = vld [vmem:[#allocation5 + $0x38] sm:$0xf]
    %v66 = vld [vmem:[#allocation5 + $0x3c] sm:$0xf]
    %v67 = vld [vmem:[#allocation5 + $0x40] sm:$0xf]
    %v68 = vld [vmem:[#allocation5 + $0x44] sm:$0xf]
    %v69 = vld [vmem:[#allocation5 + $0x48] sm:$0xf]
    %v70 = vld [vmem:[#allocation5 + $0x4c] sm:$0xf]
    %v71 = vld [vmem:[#allocation5 + $0x50] sm:$0xf]
    %v72 = vld [vmem:[#allocation5 + $0x54] sm:$0xf]
    %v73 = vld [vmem:[#allocation5 + $0x58] sm:$0xf]
    %v74 = vld [vmem:[#allocation5 + $0x5c] sm:$0xf]
    %v75 = vld [vmem:[#allocation5 + $0x60] sm:$0xf]
    %v76 = vld [vmem:[#allocation5 + $0x64] sm:$0xf]
    %v77 = vld [vmem:[#allocation5 + $0x68] sm:$0xf]
    %v78 = vld [vmem:[#allocation5 + $0x6c] sm:$0xf]
    %v79 = vld [vmem:[#allocation5 + $0x70] sm:$0xf]
    %v80 = vld [vmem:[#allocation5 + $0x74] sm:$0xf]
    %v81 = vld [vmem:[#allocation5 + $0x78] sm:$0xf]
    %v82 = vld [vmem:[#allocation5 + $0x7c] sm:$0xf]
    %v83 = vld [vmem:[#allocation5 + $0x80] sm:$0xf]
    %v84 = vld [vmem:[#allocation5 + $0x84] sm:$0xf]
    %v85 = vld [vmem:[#allocation5 + $0x88] sm:$0xf]
    %v86 = vld [vmem:[#allocation5 + $0x8c] sm:$0xf]
    %v87 = vld [vmem:[#allocation5 + $0x90] sm:$0xf]
    %v88 = vld [vmem:[#allocation5 + $0x94] sm:$0xf]
    %v89 = vld [vmem:[#allocation5 + $0x98] sm:$0xf]
    %v90 = vld [vmem:[#allocation5 + $0x9c] sm:$0xf]
    %v91 = vld [vmem:[#allocation5 + $0xa0] sm:$0xf]
    %v92 = vld [vmem:[#allocation5 + $0xa4] sm:$0xf]
    %v93 = vld [vmem:[#allocation5 + $0xa8] sm:$0xf]
    %v94 = vld [vmem:[#allocation5 + $0xac] sm:$0xf]
    %v95 = vld [vmem:[#allocation5 + $0xb0] sm:$0xf]
    %v96 = vld [vmem:[#allocation5 + $0xb4] sm:$0xf]
    %v97 = vld [vmem:[#allocation5 + $0xb8] sm:$0xf]
    %v98 = vld [vmem:[#allocation5 + $0xbc] sm:$0xf]
    %v99 = vld [vmem:[#allocation5 + $0xc0] sm:$0xf]
    %v100 = vld [vmem:[#allocation5 + $0xc4] sm:$0xf]
    %v101 = vld [vmem:[#allocation5 + $0xc8] sm:$0xf]
    %v102 = vld [vmem:[#allocation5 + $0xcc] sm:$0xf]
    %v103 = vld [vmem:[#allocation5 + $0xd0] sm:$0xf]
    %v104 = vld [vmem:[#allocation5 + $0xd4] sm:$0xf]
    %v105 = vld [vmem:[#allocation5 + $0xd8] sm:$0xf]
    %v106 = vld [vmem:[#allocation5 + $0xdc] sm:$0xf]
    %v107 = vld [vmem:[#allocation5 + $0xe0] sm:$0xf]
    %v108 = vld [vmem:[#allocation5 + $0xe4] sm:$0xf]
    %v109 = vld [vmem:[#allocation5 + $0xe8] sm:$0xf]
    %v110 = vld [vmem:[#allocation5 + $0xec] sm:$0xf]
    %v111 = vld [vmem:[#allocation5 + $0xf0] sm:$0xf]
    %v112 = vld [vmem:[#allocation5 + $0xf4] sm:$0xf]
    %v113 = vld [vmem:[#allocation5 + $0xf8] sm:$0xf]
    %v114 = vld [vmem:[#allocation5 + $0xfc] sm:$0xf]
    %v115 = vld [vmem:[%s2] sm:$0x1]
    %v117 = vperm.slane %v115, 0
    %v123 = vunpack.c.l.b16 %v47
    %v124 = vunpack.c.h.b16 %v47
    %v125 = vunpack.c.l.b16 %v48
    %v126 = vunpack.c.h.b16 %v48
    %v127 = vunpack.c.l.b16 %v49
    %v128 = vunpack.c.h.b16 %v49
    %v129 = vunpack.c.l.b16 %v50
    %v130 = vunpack.c.h.b16 %v50
    %v131 = vpack.c.b16 %v127, %v123
    %v132 = vpack.c.b16 %v128, %v124
    %v133 = vpack.c.b16 %v129, %v125
    %v134 = vpack.c.b16 %v130, %v126
    %v203 = vunpack.c.l.b16 %v51
    %v204 = vunpack.c.l.b16 %v52
    %v205 = vunpack.c.l.b16 %v53
    %v206 = vunpack.c.l.b16 %v54
    %v207 = vunpack.c.l.b16 %v55
    %v208 = vunpack.c.l.b16 %v56
    %v209 = vunpack.c.l.b16 %v57
    %v210 = vunpack.c.l.b16 %v58
    %v211 = vunpack.c.l.b16 %v59
    %v212 = vunpack.c.l.b16 %v60
    %v213 = vunpack.c.l.b16 %v61
    %v214 = vunpack.c.l.b16 %v62
    %v215 = vunpack.c.l.b16 %v63
    %v216 = vunpack.c.l.b16 %v64
    %v217 = vunpack.c.l.b16 %v65
    %v218 = vunpack.c.l.b16 %v66
    %v219 = vunpack.c.l.b16 %v67
    %v220 = vunpack.c.l.b16 %v68
    %v221 = vunpack.c.l.b16 %v69
    %v222 = vunpack.c.l.b16 %v70
    %v223 = vunpack.c.l.b16 %v71
    %v224 = vunpack.c.l.b16 %v72
    %v225 = vunpack.c.l.b16 %v73
    %v226 = vunpack.c.l.b16 %v74
    %v227 = vunpack.c.l.b16 %v75
    %v228 = vunpack.c.l.b16 %v76
    %v229 = vunpack.c.l.b16 %v77
    %v230 = vunpack.c.l.b16 %v78
    %v231 = vunpack.c.l.b16 %v79
    %v232 = vunpack.c.l.b16 %v80
    %v233 = vunpack.c.l.b16 %v81
    %v234 = vunpack.c.l.b16 %v82
    %v235 = vunpack.c.l.b16 %v83
    %v236 = vunpack.c.l.b16 %v84
    %v237 = vunpack.c.l.b16 %v85
    %v238 = vunpack.c.l.b16 %v86
    %v239 = vunpack.c.l.b16 %v87
    %v240 = vunpack.c.l.b16 %v88
    %v241 = vunpack.c.l.b16 %v89
    %v242 = vunpack.c.l.b16 %v90
    %v243 = vunpack.c.l.b16 %v91
    %v244 = vunpack.c.l.b16 %v92
    %v245 = vunpack.c.l.b16 %v93
    %v246 = vunpack.c.l.b16 %v94
    %v247 = vunpack.c.l.b16 %v95
    %v248 = vunpack.c.l.b16 %v96
    %v249 = vunpack.c.l.b16 %v97
    %v250 = vunpack.c.l.b16 %v98
    %v251 = vunpack.c.l.b16 %v99
    %v252 = vunpack.c.l.b16 %v100
    %v253 = vunpack.c.l.b16 %v101
    %v254 = vunpack.c.l.b16 %v102
    %v255 = vunpack.c.l.b16 %v103
    %v256 = vunpack.c.l.b16 %v104
    %v257 = vunpack.c.l.b16 %v105
    %v258 = vunpack.c.l.b16 %v106
    %v259 = vunpack.c.l.b16 %v107
    %v260 = vunpack.c.l.b16 %v108
    %v261 = vunpack.c.l.b16 %v109
    %v262 = vunpack.c.l.b16 %v110
    %v263 = vunpack.c.l.b16 %v111
    %v264 = vunpack.c.l.b16 %v112
    %v265 = vunpack.c.l.b16 %v113
    %v266 = vunpack.c.l.b16 %v114
    %v267 = vpack.c.b16 %v204, %v203
    %v268 = vpack.c.b16 %v206, %v205
    %v269 = vpack.c.b16 %v208, %v207
    %v270 = vpack.c.b16 %v210, %v209
    %v271 = vpack.c.b16 %v212, %v211
    %v272 = vpack.c.b16 %v214, %v213
    %v273 = vpack.c.b16 %v216, %v215
    %v274 = vpack.c.b16 %v218, %v217
    %v275 = vpack.c.b16 %v220, %v219
    %v276 = vpack.c.b16 %v222, %v221
    %v277 = vpack.c.b16 %v224, %v223
    %v278 = vpack.c.b16 %v226, %v225
    %v279 = vpack.c.b16 %v228, %v227
    %v280 = vpack.c.b16 %v230, %v229
    %v281 = vpack.c.b16 %v232, %v231
    %v282 = vpack.c.b16 %v234, %v233
    %v283 = vpack.c.b16 %v236, %v235
    %v284 = vpack.c.b16 %v238, %v237
    %v285 = vpack.c.b16 %v240, %v239
    %v286 = vpack.c.b16 %v242, %v241
    %v287 = vpack.c.b16 %v244, %v243
    %v288 = vpack.c.b16 %v246, %v245
    %v289 = vpack.c.b16 %v248, %v247
    %v290 = vpack.c.b16 %v250, %v249
    %v291 = vpack.c.b16 %v252, %v251
    %v292 = vpack.c.b16 %v254, %v253
    %v293 = vpack.c.b16 %v256, %v255
    %v294 = vpack.c.b16 %v258, %v257
    %v295 = vpack.c.b16 %v260, %v259
    %v296 = vpack.c.b16 %v262, %v261
    %v297 = vpack.c.b16 %v264, %v263
    %v298 = vpack.c.b16 %v266, %v265
    %331 = vmatpush.bf16.msra.mxu0 %v274
    %332 = vmatpush.bf16.msra.mxu0 %v273
    %333 = vmatpush.bf16.msra.mxu0 %v272
    %334 = vmatpush.bf16.msra.mxu0 %v271
    %335 = vmatpush.bf16.msra.mxu0 %v270
    %336 = vmatpush.bf16.msra.mxu0 %v269
    %337 = vmatpush.bf16.msra.mxu0 %v268
    %338 = vmatpush.bf16.msra.mxu0 %v267
    %339 = vmatmul.bf16.gmra.mxu0 %v131
    %v340 = vpop.f32.mrf.mxu0
    %v341 = vadd.f32 %v117, %v340
    %v342 = vpop.f32.mrf.mxu0
    %v343 = vadd.f32 %v117, %v342
    %344 = vdwg.mxu0
    %345 = vmatpush.bf16.msra.mxu0 %v282
    %346 = vmatpush.bf16.msra.mxu0 %v281
    %347 = vmatpush.bf16.msra.mxu0 %v280
    %348 = vmatpush.bf16.msra.mxu0 %v279
    %349 = vmatpush.bf16.msra.mxu0 %v278
    %350 = vmatpush.bf16.msra.mxu0 %v277
    %351 = vmatpush.bf16.msra.mxu0 %v276
    %352 = vmatpush.bf16.msra.mxu0 %v275
    %353 = vmatmul.bf16.gmra.mxu0 %v132
    %v354 = vpop.f32.mrf.mxu0
    %v355 = vadd.f32 %v341, %v354
    %v356 = vpop.f32.mrf.mxu0
    %v357 = vadd.f32 %v343, %v356
    %358 = vdwg.mxu0
    %359 = vmatpush.bf16.msra.mxu0 %v290
    %360 = vmatpush.bf16.msra.mxu0 %v289
    %361 = vmatpush.bf16.msra.mxu0 %v288
    %362 = vmatpush.bf16.msra.mxu0 %v287
    %363 = vmatpush.bf16.msra.mxu0 %v286
    %364 = vmatpush.bf16.msra.mxu0 %v285
    %365 = vmatpush.bf16.msra.mxu0 %v284
    %366 = vmatpush.bf16.msra.mxu0 %v283
    %367 = vmatmul.bf16.gmra.mxu0 %v133
    %v368 = vpop.f32.mrf.mxu0
    %v369 = vadd.f32 %v355, %v368
    %v370 = vpop.f32.mrf.mxu0
    %v371 = vadd.f32 %v357, %v370
    %372 = vdwg.mxu0
    %373 = vmatpush.bf16.msra.mxu0 %v298
    %374 = vmatpush.bf16.msra.mxu0 %v297
    %375 = vmatpush.bf16.msra.mxu0 %v296
    %376 = vmatpush.bf16.msra.mxu0 %v295
    %377 = vmatpush.bf16.msra.mxu0 %v294
    %378 = vmatpush.bf16.msra.mxu0 %v293
    %379 = vmatpush.bf16.msra.mxu0 %v292
    %380 = vmatpush.bf16.msra.mxu0 %v291
    %381 = vmatmul.bf16.gmra.mxu0 %v134
    %v382 = vpop.f32.mrf.mxu0
    %v383 = vadd.f32 %v369, %v382
    %v384 = vpop.f32.mrf.mxu0
    %v385 = vadd.f32 %v371, %v384
    %386 = vdwg.mxu0
    %v387 = vmax.f32 %v383, 0.0
    %v388 = vmax.f32 %v385, 0.0
    %389 = vst [vmem:[#allocation7] sm:$0xff] %v387
    %390 = vst [vmem:[#allocation7 + $0x8] sm:$0xff] %v388
    // Predicated region
    $region22: #{tpu_custom_call.1} parent=1 // pred_check
      _
    $region23: #{tpu_custom_call.1} parent=1 // pred_check_branch
      %392 = sbr.rel (0) target = $region25
    $region24: #{tpu_custom_call.1} parent=1 // pred_region
      %394 = vsyncadd [#allocation4], 0
      %s395 = sshll.u32 [#allocation7], 4
      %s396 = int_to_ptr.vmem [resolvable:$true] %s395
      %s397 = sshll.u32 %s3, 4
      %s398 = int_to_ptr.hbm [resolvable:$true] %s397
      %403 = dma.vmem_to_hbm [thread:$0]  %s396, 256, %s398, [#allocation4], 128, 128, 8
    $region25: #{tpu_custom_call.1} parent=1 // pred_fallthru
      _
    // Predicated region
    $region26: #{tpu_custom_call.1} parent=1 // pred_check
      _
    $region27: #{tpu_custom_call.1} parent=1 // pred_check_branch
      %405 = sbr.rel (0) target = $region29
    $region28: #{tpu_custom_call.1} parent=1 // pred_region
      %407 = dma.done [#allocation4], 256
    $region29: #{tpu_custom_call.1} parent=1 // pred_fallthru
      _
    %408 = vsyncpa [#allocation3], 1
    %409 = vsyncpa [#allocation6], 1
    %410 = vsyncpa [#allocation4], 1

</llo_original>
